<compile_context>
chip_gen: v5e
topology: v5e:2x2
jax: 0.10.0
libtpu: 0.0.40
codegen_flags: <defaults>
</compile_context>

<pallas_src>
import math

import jax
import jax.numpy as jnp
from jax import lax
from jax.experimental import pallas as pl
from jax.experimental.pallas import tpu as pltpu

# ----- small GPT-2 config (synthetic) -----
BATCH = 2
SEQ = 8
HIDDEN = 32
NUM_HEADS = 4
HEAD_DIM = HIDDEN // NUM_HEADS
INNER = 4 * HIDDEN          # config.n_inner is None -> 4*hidden
LN_EPS = 1e-5

MATMUL_DTYPE = jnp.bfloat16   # MXU operands; accumulation stays f32
NEG_BIG = -1e30               # masked-score value (exp() underflows to exactly 0)

assert INNER <= 128, "param-packing row for c_fc bias assumes INNER <= 128"


def _gelu_new(x):
    c = math.sqrt(2.0 / math.pi)
    return 0.5 * x * (1.0 + jnp.tanh(c * (x + 0.044715 * x * x * x)))


def _layernorm(h, g, b):
    mu = jnp.mean(h, axis=-1, keepdims=True)
    var = jnp.mean(jnp.square(h - mu), axis=-1, keepdims=True)
    return (h - mu) * lax.rsqrt(var + LN_EPS) * g + b


def gpt2_block_kernel(x_ref, wqkv_ref, wo_ref, wfc_ref, wfp_ref, pvec_ref, o_ref):
    x = x_ref[...]                                   # (R, H) f32, R = B*S
    pv = pvec_ref[...]                               # (8, 128) f32 packed params
    ln1g = pv[0, :HIDDEN]
    ln1b = pv[1, :HIDDEN]
    ln2g = pv[2, :HIDDEN]
    ln2b = pv[3, :HIDDEN]
    b_qkv = pv[4, :3 * HIDDEN]                       # q-part already pre-scaled
    b_o = pv[5, :HIDDEN]
    b_fc = pv[6, :INNER]
    b_fp = pv[7, :HIDDEN]

    # ---- ln_1 (f32) ----
    h = _layernorm(x, ln1g, ln1b)

    # ---- fused q/k/v projection: one (R,H)@(H,3H) MXU pass ----
    qkv = jnp.dot(h.astype(MATMUL_DTYPE), wqkv_ref[...],
                  preferred_element_type=jnp.float32) + b_qkv          # (R, 3H)

    # split q/k/v (static lane slices), cast once, lift batch to a leading dim
    q = qkv[:, :HIDDEN].astype(MATMUL_DTYPE).reshape(BATCH, SEQ, HIDDEN)
    k = qkv[:, HIDDEN:2 * HIDDEN].astype(MATMUL_DTYPE).reshape(BATCH, SEQ, HIDDEN)
    v = qkv[:, 2 * HIDDEN:].astype(MATMUL_DTYPE).reshape(BATCH, SEQ, HIDDEN)

    # ---- causal mask built in-kernel: plain (S, S), no HBM bias input ----
    row = lax.broadcasted_iota(jnp.int32, (SEQ, SEQ), 0)
    col = lax.broadcasted_iota(jnp.int32, (SEQ, SEQ), 1)
    causal = row >= col                                                # (S, S) bool

    # ---- attention at (B, S, S) per head; batch never folded into rows ----
    head_outs = []
    for hidx in range(NUM_HEADS):
        sl = slice(hidx * HEAD_DIM, (hidx + 1) * HEAD_DIM)
        q_h, k_h, v_h = q[:, :, sl], k[:, :, sl], v[:, :, sl]          # (B,S,HD) bf16
        s = jnp.einsum("bqd,bkd->bqk", q_h, k_h,
                       preferred_element_type=jnp.float32)             # (B,S,S) f32
        s = jnp.where(causal[None], s, NEG_BIG)
        s = s - jnp.max(s, axis=-1, keepdims=True)
        p = jnp.exp(s)
        p = p * pl.reciprocal(jnp.sum(p, axis=-1, keepdims=True), approx=True)
        head_outs.append(
            jnp.einsum("bqk,bkd->bqd", p.astype(MATMUL_DTYPE), v_h,
                       preferred_element_type=jnp.float32))            # (B,S,HD) f32

    # merge heads (cheap static lane concat) -> one c_proj matmul with K=H
    a = jnp.concatenate(head_outs, axis=-1).reshape(BATCH * SEQ, HIDDEN)
    attn_out = jnp.dot(a.astype(MATMUL_DTYPE), wo_ref[...],
                       preferred_element_type=jnp.float32) + b_o       # (R, H)
    h1 = attn_out + x                                                  # residual 1

    # ---- ln_2 + MLP (gelu_new) ----
    h2 = _layernorm(h1, ln2g, ln2b)
    ff = jnp.dot(h2.astype(MATMUL_DTYPE), wfc_ref[...],
                 preferred_element_type=jnp.float32) + b_fc            # (R, INNER)
    ff = _gelu_new(ff)
    ff = jnp.dot(ff.astype(MATMUL_DTYPE), wfp_ref[...],
                 preferred_element_type=jnp.float32) + b_fp            # (R, H)

    o_ref[...] = h1 + ff                                               # residual 2


def _full_spec(shape):
    nd = len(shape)

    def idx(i):
        return (0,) * nd

    return pl.BlockSpec(shape, idx)


def prepare_inputs(params):
    """One-time (hoisted) weight restructuring: bf16 casts, scale folding,
    and packing of all tiny vectors into a single lane-dense (8,128) tensor."""
    (ln1g, ln1b, wqkv, bqkv, wap, bap, ln2g, ln2b, wfc, bfc, wfp, bfp) = params
    scale = 1.0 / math.sqrt(HEAD_DIM)

    # fold 1/sqrt(head_dim) into the q columns of c_attn (weights + bias)
    col_scale = jnp.concatenate(
        [jnp.full((HIDDEN,), scale, jnp.float32),
         jnp.ones((2 * HIDDEN,), jnp.float32)])
    wqkv_s = (wqkv * col_scale[None, :]).astype(MATMUL_DTYPE)          # (H, 3H)
    bqkv_s = (bqkv[0] * col_scale).astype(jnp.float32)                 # (3H,)

    wo = wap.astype(MATMUL_DTYPE)                                      # (H, H)
    wfc_c = wfc.astype(MATMUL_DTYPE)                                   # (H, INNER)
    wfp_c = wfp.astype(MATMUL_DTYPE)                                   # (INNER, H)

    pvec = jnp.zeros((8, 128), jnp.float32)
    pvec = pvec.at[0, :HIDDEN].set(ln1g[0])
    pvec = pvec.at[1, :HIDDEN].set(ln1b[0])
    pvec = pvec.at[2, :HIDDEN].set(ln2g[0])
    pvec = pvec.at[3, :HIDDEN].set(ln2b[0])
    pvec = pvec.at[4, :3 * HIDDEN].set(bqkv_s)
    pvec = pvec.at[5, :HIDDEN].set(bap[0])
    pvec = pvec.at[6, :INNER].set(bfc[0])
    pvec = pvec.at[7, :HIDDEN].set(bfp[0])

    return (wqkv_s, wo, wfc_c, wfp_c, pvec)


def gated_gpt2_block_prepared(x, prepared):
    B, S, H = x.shape
    R = B * S
    wqkv_s, wo, wfc_c, wfp_c, pvec = prepared
    args = (x.reshape(R, H), wqkv_s, wo, wfc_c, wfp_c, pvec)

    out = pl.pallas_call(
        gpt2_block_kernel,
        out_shape=jax.ShapeDtypeStruct((R, H), jnp.float32),
        grid=(1,),                                   # single step at this size
        in_specs=[_full_spec(a.shape) for a in args],
        out_specs=_full_spec((R, H)),
        compiler_params=pltpu.CompilerParams(
            dimension_semantics=("arbitrary",)),
    )(*args)
    return out.reshape(B, S, H)


def gated_gpt2_block(x, params):
    return gated_gpt2_block_prepared(x, prepare_inputs(params))


# ---- pure-JAX f32 reference (matches the PyTorch module semantics) ----
def reference_block(x, params):
    (ln1g, ln1b, wqkv, bqkv, wap, bap, ln2g, ln2b, wfc, bfc, wfp, bfp) = params
    B, S, H = x.shape
    h = _layernorm(x, ln1g[0], ln1b[0])
    qkv = h @ wqkv + bqkv[0]
    q, k, v = jnp.split(qkv, 3, axis=-1)

    def split_heads(t):
        return t.reshape(B, S, NUM_HEADS, HEAD_DIM).transpose(0, 2, 1, 3)

    q, k, v = split_heads(q), split_heads(k), split_heads(v)
    scores = jnp.einsum("bhqd,bhkd->bhqk", q, k) / math.sqrt(HEAD_DIM)
    causal = jnp.tril(jnp.ones((S, S), bool))
    scores = jnp.where(causal, scores, jnp.finfo(jnp.float32).min)
    p = jax.nn.softmax(scores, axis=-1)
    attn = jnp.einsum("bhqk,bhkd->bhqd", p, v).transpose(0, 2, 1, 3).reshape(B, S, H)
    attn = attn @ wap + bap[0]
    h1 = attn + x
    h2 = _layernorm(h1, ln2g[0], ln2b[0])
    ff = _gelu_new(h2 @ wfc + bfc[0])
    ff = ff @ wfp + bfp[0]
    return h1 + ff


def make_params(key):
    ks = jax.random.split(key, 8)
    f = jnp.float32
    return (
        jnp.ones((1, HIDDEN), f),                                    # ln_1 gamma
        jnp.zeros((1, HIDDEN), f),                                   # ln_1 beta
        0.02 * jax.random.normal(ks[0], (HIDDEN, 3 * HIDDEN), f),    # c_attn W
        0.01 * jax.random.normal(ks[1], (1, 3 * HIDDEN), f),         # c_attn b
        0.02 * jax.random.normal(ks[2], (HIDDEN, HIDDEN), f),        # attn c_proj W
        0.01 * jax.random.normal(ks[3], (1, HIDDEN), f),             # attn c_proj b
        jnp.ones((1, HIDDEN), f),                                    # ln_2 gamma
        jnp.zeros((1, HIDDEN), f),                                   # ln_2 beta
        0.02 * jax.random.normal(ks[4], (HIDDEN, INNER), f),         # mlp c_fc W
        0.01 * jax.random.normal(ks[5], (1, INNER), f),              # mlp c_fc b
        0.02 * jax.random.normal(ks[6], (INNER, HIDDEN), f),         # mlp c_proj W
        0.01 * jax.random.normal(ks[7], (1, HIDDEN), f),             # mlp c_proj b
    )


if __name__ == "__main__":
    key = jax.random.PRNGKey(0)
    kx, kp = jax.random.split(key)
    x = jax.random.normal(kx, (BATCH, SEQ, HIDDEN), jnp.float32)
    params = make_params(kp)

    # one-time, hoisted out of the per-call path
    prepared = jax.block_until_ready(prepare_inputs(params))

    out = gated_gpt2_block_prepared(x, prepared)
    out = jax.block_until_ready(out)

    ref = reference_block(x, params)
    assert out.shape == (BATCH, SEQ, HIDDEN)
    # bf16 MXU operands (f32 accumulation) -> compare against f32 reference at 1e-2
    assert jnp.allclose(out, ref, atol=1e-2, rtol=1e-2), "mismatch vs reference"

    # TODO(synk): ConcreteGate / head_mask / cross-attention / KV-cache /
    # use_cache branches are inert with the default module state
    # (has_gates=False, head_mask=None, layer_past=None, use_cache=False)
    # and are not implemented in the kernel.
    print("KERNEL_OK")
</pallas_src>

<mosaic_0001>
module attributes {stable_mosaic.version = 11 : i64} {
  func.func @gpt2_block_kernel(%arg0: i32, %arg1: memref<16x32xf32, #tpu.memory_space<vmem>>, %arg2: memref<32x96xbf16, #tpu.memory_space<vmem>>, %arg3: memref<32x32xbf16, #tpu.memory_space<vmem>>, %arg4: memref<32x128xbf16, #tpu.memory_space<vmem>>, %arg5: memref<128x32xbf16, #tpu.memory_space<vmem>>, %arg6: memref<8x128xf32, #tpu.memory_space<vmem>>, %arg7: memref<16x32xf32, #tpu.memory_space<vmem>>) attributes {dimension_semantics = [#tpu.dimension_semantics<arbitrary>], iteration_bounds = array<i64: 1>, scalar_prefetch = 0 : i64, scratch_operands = 0 : i64, tpu.core_type = #tpu.core_type<tc>, window_params = [{pipeline_mode = #tpu.pipeline_mode<synchronous>, transform_indices = @transform_0, window_bounds = array<i64: 16, 32>}, {pipeline_mode = #tpu.pipeline_mode<synchronous>, transform_indices = @transform_1, window_bounds = array<i64: 32, 96>}, {pipeline_mode = #tpu.pipeline_mode<synchronous>, transform_indices = @transform_2, window_bounds = array<i64: 32, 32>}, {pipeline_mode = #tpu.pipeline_mode<synchronous>, transform_indices = @transform_3, window_bounds = array<i64: 32, 128>}, {pipeline_mode = #tpu.pipeline_mode<synchronous>, transform_indices = @transform_4, window_bounds = array<i64: 128, 32>}, {pipeline_mode = #tpu.pipeline_mode<synchronous>, transform_indices = @transform_5, window_bounds = array<i64: 8, 128>}, {pipeline_mode = #tpu.pipeline_mode<synchronous>, transform_indices = @transform_6, window_bounds = array<i64: 16, 32>}]} {
    %c0 = arith.constant 0 : index
    %c0_0 = arith.constant 0 : index
    %0 = vector.load %arg1[%c0, %c0_0] : memref<16x32xf32, #tpu.memory_space<vmem>>, vector<16x32xf32>
    %c0_1 = arith.constant 0 : index
    %c0_2 = arith.constant 0 : index
    %1 = vector.load %arg6[%c0_1, %c0_2] : memref<8x128xf32, #tpu.memory_space<vmem>>, vector<8x128xf32>
    %2 = vector.extract_strided_slice %1 {offsets = [0, 0], sizes = [1, 32], strides = [1, 1]} : vector<8x128xf32> to vector<1x32xf32>
    %3 = vector.shape_cast %2 : vector<1x32xf32> to vector<32xf32>
    %4 = vector.extract_strided_slice %1 {offsets = [1, 0], sizes = [1, 32], strides = [1, 1]} : vector<8x128xf32> to vector<1x32xf32>
    %5 = vector.shape_cast %4 : vector<1x32xf32> to vector<32xf32>
    %6 = vector.extract_strided_slice %1 {offsets = [2, 0], sizes = [1, 32], strides = [1, 1]} : vector<8x128xf32> to vector<1x32xf32>
    %7 = vector.shape_cast %6 : vector<1x32xf32> to vector<32xf32>
    %8 = vector.extract_strided_slice %1 {offsets = [3, 0], sizes = [1, 32], strides = [1, 1]} : vector<8x128xf32> to vector<1x32xf32>
    %9 = vector.shape_cast %8 : vector<1x32xf32> to vector<32xf32>
    %10 = vector.extract_strided_slice %1 {offsets = [4, 0], sizes = [1, 96], strides = [1, 1]} : vector<8x128xf32> to vector<1x96xf32>
    %11 = vector.shape_cast %10 : vector<1x96xf32> to vector<96xf32>
    %12 = vector.extract_strided_slice %1 {offsets = [5, 0], sizes = [1, 32], strides = [1, 1]} : vector<8x128xf32> to vector<1x32xf32>
    %13 = vector.shape_cast %12 : vector<1x32xf32> to vector<32xf32>
    %14 = vector.extract_strided_slice %1 {offsets = [6, 0], sizes = [1, 128], strides = [1, 1]} : vector<8x128xf32> to vector<1x128xf32>
    %15 = vector.shape_cast %14 : vector<1x128xf32> to vector<128xf32>
    %16 = vector.extract_strided_slice %1 {offsets = [7, 0], sizes = [1, 32], strides = [1, 1]} : vector<8x128xf32> to vector<1x32xf32>
    %17 = vector.shape_cast %16 : vector<1x32xf32> to vector<32xf32>
    %cst = arith.constant dense<0.000000e+00> : vector<16xf32>
    %18 = vector.multi_reduction <add>, %0, %cst [1] : vector<16x32xf32> to vector<16xf32>
    %19 = vector.shape_cast %18 : vector<16xf32> to vector<16x1xf32>
    %cst_3 = arith.constant 3.200000e+01 : f32
    %20 = vector.broadcast %cst_3 : f32 to vector<16x1xf32>
    %21 = arith.divf %19, %20 : vector<16x1xf32>
    %22 = vector.broadcast %21 : vector<16x1xf32> to vector<16x32xf32>
    %23 = arith.subf %0, %22 : vector<16x32xf32>
    %24 = arith.mulf %23, %23 : vector<16x32xf32>
    %cst_4 = arith.constant dense<0.000000e+00> : vector<16xf32>
    %25 = vector.multi_reduction <add>, %24, %cst_4 [1] : vector<16x32xf32> to vector<16xf32>
    %26 = vector.shape_cast %25 : vector<16xf32> to vector<16x1xf32>
    %cst_5 = arith.constant 3.200000e+01 : f32
    %27 = vector.broadcast %cst_5 : f32 to vector<16x1xf32>
    %28 = arith.divf %26, %27 : vector<16x1xf32>
    %29 = vector.broadcast %21 : vector<16x1xf32> to vector<16x32xf32>
    %30 = arith.subf %0, %29 : vector<16x32xf32>
    %cst_6 = arith.constant 9.99999974E-6 : f32
    %31 = vector.broadcast %cst_6 : f32 to vector<16x1xf32>
    %32 = arith.addf %28, %31 : vector<16x1xf32>
    %33 = math.rsqrt %32 : vector<16x1xf32>
    %34 = vector.broadcast %33 : vector<16x1xf32> to vector<16x32xf32>
    %35 = arith.mulf %30, %34 : vector<16x32xf32>
    %36 = vector.shape_cast %3 : vector<32xf32> to vector<1x32xf32>
    %37 = vector.broadcast %36 : vector<1x32xf32> to vector<16x32xf32>
    %38 = arith.mulf %35, %37 : vector<16x32xf32>
    %39 = vector.shape_cast %5 : vector<32xf32> to vector<1x32xf32>
    %40 = vector.broadcast %39 : vector<1x32xf32> to vector<16x32xf32>
    %41 = arith.addf %38, %40 : vector<16x32xf32>
    %42 = arith.truncf %41 : vector<16x32xf32> to vector<16x32xbf16>
    %c0_7 = arith.constant 0 : index
    %c0_8 = arith.constant 0 : index
    %43 = vector.load %arg2[%c0_7, %c0_8] : memref<32x96xbf16, #tpu.memory_space<vmem>>, vector<32x96xbf16>
    %cst_9 = arith.constant dense<0.000000e+00> : vector<16x96xf32>
    %44 = tpu.matmul %42, %43, %cst_9 {dimension_numbers = #tpu.dot_dimension_numbers<[1], [0], [0], [1], [0, 0, 1, 1], [], []>} : vector<16x32xbf16>, vector<32x96xbf16>, vector<16x96xf32> -> vector<16x96xf32>
    %45 = vector.shape_cast %11 : vector<96xf32> to vector<1x96xf32>
    %46 = vector.broadcast %45 : vector<1x96xf32> to vector<16x96xf32>
    %47 = arith.addf %44, %46 : vector<16x96xf32>
    %48 = vector.extract_strided_slice %47 {offsets = [0, 0], sizes = [16, 32], strides = [1, 1]} : vector<16x96xf32> to vector<16x32xf32>
    %49 = arith.truncf %48 : vector<16x32xf32> to vector<16x32xbf16>
    %50 = vector.shape_cast %49 : vector<16x32xbf16> to vector<2x8x32xbf16>
    %51 = vector.extract_strided_slice %47 {offsets = [0, 32], sizes = [16, 32], strides = [1, 1]} : vector<16x96xf32> to vector<16x32xf32>
    %52 = arith.truncf %51 : vector<16x32xf32> to vector<16x32xbf16>
    %53 = vector.shape_cast %52 : vector<16x32xbf16> to vector<2x8x32xbf16>
    %54 = vector.extract_strided_slice %47 {offsets = [0, 64], sizes = [16, 32], strides = [1, 1]} : vector<16x96xf32> to vector<16x32xf32>
    %55 = arith.truncf %54 : vector<16x32xf32> to vector<16x32xbf16>
    %56 = vector.shape_cast %55 : vector<16x32xbf16> to vector<2x8x32xbf16>
    %57 = tpu.iota {dimensions = array<i32: 0>} : vector<8x8xi32>
    %58 = tpu.iota {dimensions = array<i32: 1>} : vector<8x8xi32>
    %59 = arith.cmpi sge, %57, %58 : vector<8x8xi32>
    %60 = vector.extract_strided_slice %50 {offsets = [0, 0, 0], sizes = [2, 8, 8], strides = [1, 1, 1]} : vector<2x8x32xbf16> to vector<2x8x8xbf16>
    %61 = vector.extract_strided_slice %53 {offsets = [0, 0, 0], sizes = [2, 8, 8], strides = [1, 1, 1]} : vector<2x8x32xbf16> to vector<2x8x8xbf16>
    %62 = vector.extract_strided_slice %56 {offsets = [0, 0, 0], sizes = [2, 8, 8], strides = [1, 1, 1]} : vector<2x8x32xbf16> to vector<2x8x8xbf16>
    "tpu.trace_start"() <{level = 10 : i32, message = "bqd,bkd->bqk"}> : () -> ()
    %cst_10 = arith.constant dense<0.000000e+00> : vector<2x8x8xf32>
    %63 = tpu.matmul %60, %61, %cst_10 {dimension_numbers = #tpu.dot_dimension_numbers<[2], [2], [1], [1], [0, 0, 0, 1, 1, 1], [0], [0]>} : vector<2x8x8xbf16>, vector<2x8x8xbf16>, vector<2x8x8xf32> -> vector<2x8x8xf32>
    "tpu.trace_stop"() : () -> ()
    %64 = vector.shape_cast %59 : vector<8x8xi1> to vector<1x8x8xi1>
    %cst_11 = arith.constant -1.000000e+30 : f32
    %65 = vector.shape_cast %64 : vector<1x8x8xi1> to vector<1x8x8xi1>
    %66 = vector.broadcast %65 : vector<1x8x8xi1> to vector<2x8x8xi1>
    %67 = vector.broadcast %cst_11 : f32 to vector<2x8x8xf32>
    %68 = arith.select %66, %63, %67 : vector<2x8x8xi1>, vector<2x8x8xf32>
    %cst_12 = arith.constant dense<0xFF800000> : vector<2x8xf32>
    %69 = vector.multi_reduction <maximumf>, %68, %cst_12 [2] : vector<2x8x8xf32> to vector<2x8xf32>
    %70 = vector.shape_cast %69 : vector<2x8xf32> to vector<2x8x1xf32>
    %71 = vector.broadcast %70 : vector<2x8x1xf32> to vector<2x8x8xf32>
    %72 = arith.subf %68, %71 : vector<2x8x8xf32>
    %73 = math.exp %72 : vector<2x8x8xf32>
    %cst_13 = arith.constant dense<0.000000e+00> : vector<2x8xf32>
    %74 = vector.multi_reduction <add>, %73, %cst_13 [2] : vector<2x8x8xf32> to vector<2x8xf32>
    %75 = vector.shape_cast %74 : vector<2x8xf32> to vector<2x8x1xf32>
    %76 = tpu.reciprocal %75 {approx = true} : vector<2x8x1xf32> -> vector<2x8x1xf32>
    %77 = vector.broadcast %76 : vector<2x8x1xf32> to vector<2x8x8xf32>
    %78 = arith.mulf %73, %77 : vector<2x8x8xf32>
    %79 = arith.truncf %78 : vector<2x8x8xf32> to vector<2x8x8xbf16>
    "tpu.trace_start"() <{level = 10 : i32, message = "bqk,bkd->bqd"}> : () -> ()
    %cst_14 = arith.constant dense<0.000000e+00> : vector<2x8x8xf32>
    %80 = tpu.matmul %79, %62, %cst_14 {dimension_numbers = #tpu.dot_dimension_numbers<[2], [1], [1], [2], [0, 0, 0, 1, 1, 2], [0], [0]>} : vector<2x8x8xbf16>, vector<2x8x8xbf16>, vector<2x8x8xf32> -> vector<2x8x8xf32>
    "tpu.trace_stop"() : () -> ()
    %81 = vector.extract_strided_slice %50 {offsets = [0, 0, 8], sizes = [2, 8, 8], strides = [1, 1, 1]} : vector<2x8x32xbf16> to vector<2x8x8xbf16>
    %82 = vector.extract_strided_slice %53 {offsets = [0, 0, 8], sizes = [2, 8, 8], strides = [1, 1, 1]} : vector<2x8x32xbf16> to vector<2x8x8xbf16>
    %83 = vector.extract_strided_slice %56 {offsets = [0, 0, 8], sizes = [2, 8, 8], strides = [1, 1, 1]} : vector<2x8x32xbf16> to vector<2x8x8xbf16>
    "tpu.trace_start"() <{level = 10 : i32, message = "bqd,bkd->bqk"}> : () -> ()
    %cst_15 = arith.constant dense<0.000000e+00> : vector<2x8x8xf32>
    %84 = tpu.matmul %81, %82, %cst_15 {dimension_numbers = #tpu.dot_dimension_numbers<[2], [2], [1], [1], [0, 0, 0, 1, 1, 1], [0], [0]>} : vector<2x8x8xbf16>, vector<2x8x8xbf16>, vector<2x8x8xf32> -> vector<2x8x8xf32>
    "tpu.trace_stop"() : () -> ()
    %85 = vector.shape_cast %59 : vector<8x8xi1> to vector<1x8x8xi1>
    %cst_16 = arith.constant -1.000000e+30 : f32
    %86 = vector.shape_cast %85 : vector<1x8x8xi1> to vector<1x8x8xi1>
    %87 = vector.broadcast %86 : vector<1x8x8xi1> to vector<2x8x8xi1>
    %88 = vector.broadcast %cst_16 : f32 to vector<2x8x8xf32>
    %89 = arith.select %87, %84, %88 : vector<2x8x8xi1>, vector<2x8x8xf32>
    %cst_17 = arith.constant dense<0xFF800000> : vector<2x8xf32>
    %90 = vector.multi_reduction <maximumf>, %89, %cst_17 [2] : vector<2x8x8xf32> to vector<2x8xf32>
    %91 = vector.shape_cast %90 : vector<2x8xf32> to vector<2x8x1xf32>
    %92 = vector.broadcast %91 : vector<2x8x1xf32> to vector<2x8x8xf32>
    %93 = arith.subf %89, %92 : vector<2x8x8xf32>
    %94 = math.exp %93 : vector<2x8x8xf32>
    %cst_18 = arith.constant dense<0.000000e+00> : vector<2x8xf32>
    %95 = vector.multi_reduction <add>, %94, %cst_18 [2] : vector<2x8x8xf32> to vector<2x8xf32>
    %96 = vector.shape_cast %95 : vector<2x8xf32> to vector<2x8x1xf32>
    %97 = tpu.reciprocal %96 {approx = true} : vector<2x8x1xf32> -> vector<2x8x1xf32>
    %98 = vector.broadcast %97 : vector<2x8x1xf32> to vector<2x8x8xf32>
    %99 = arith.mulf %94, %98 : vector<2x8x8xf32>
    %100 = arith.truncf %99 : vector<2x8x8xf32> to vector<2x8x8xbf16>
    "tpu.trace_start"() <{level = 10 : i32, message = "bqk,bkd->bqd"}> : () -> ()
    %cst_19 = arith.constant dense<0.000000e+00> : vector<2x8x8xf32>
    %101 = tpu.matmul %100, %83, %cst_19 {dimension_numbers = #tpu.dot_dimension_numbers<[2], [1], [1], [2], [0, 0, 0, 1, 1, 2], [0], [0]>} : vector<2x8x8xbf16>, vector<2x8x8xbf16>, vector<2x8x8xf32> -> vector<2x8x8xf32>
    "tpu.trace_stop"() : () -> ()
    %102 = vector.extract_strided_slice %50 {offsets = [0, 0, 16], sizes = [2, 8, 8], strides = [1, 1, 1]} : vector<2x8x32xbf16> to vector<2x8x8xbf16>
    %103 = vector.extract_strided_slice %53 {offsets = [0, 0, 16], sizes = [2, 8, 8], strides = [1, 1, 1]} : vector<2x8x32xbf16> to vector<2x8x8xbf16>
    %104 = vector.extract_strided_slice %56 {offsets = [0, 0, 16], sizes = [2, 8, 8], strides = [1, 1, 1]} : vector<2x8x32xbf16> to vector<2x8x8xbf16>
    "tpu.trace_start"() <{level = 10 : i32, message = "bqd,bkd->bqk"}> : () -> ()
    %cst_20 = arith.constant dense<0.000000e+00> : vector<2x8x8xf32>
    %105 = tpu.matmul %102, %103, %cst_20 {dimension_numbers = #tpu.dot_dimension_numbers<[2], [2], [1], [1], [0, 0, 0, 1, 1, 1], [0], [0]>} : vector<2x8x8xbf16>, vector<2x8x8xbf16>, vector<2x8x8xf32> -> vector<2x8x8xf32>
    "tpu.trace_stop"() : () -> ()
    %106 = vector.shape_cast %59 : vector<8x8xi1> to vector<1x8x8xi1>
    %cst_21 = arith.constant -1.000000e+30 : f32
    %107 = vector.shape_cast %106 : vector<1x8x8xi1> to vector<1x8x8xi1>
    %108 = vector.broadcast %107 : vector<1x8x8xi1> to vector<2x8x8xi1>
    %109 = vector.broadcast %cst_21 : f32 to vector<2x8x8xf32>
    %110 = arith.select %108, %105, %109 : vector<2x8x8xi1>, vector<2x8x8xf32>
    %cst_22 = arith.constant dense<0xFF800000> : vector<2x8xf32>
    %111 = vector.multi_reduction <maximumf>, %110, %cst_22 [2] : vector<2x8x8xf32> to vector<2x8xf32>
    %112 = vector.shape_cast %111 : vector<2x8xf32> to vector<2x8x1xf32>
    %113 = vector.broadcast %112 : vector<2x8x1xf32> to vector<2x8x8xf32>
    %114 = arith.subf %110, %113 : vector<2x8x8xf32>
    %115 = math.exp %114 : vector<2x8x8xf32>
    %cst_23 = arith.constant dense<0.000000e+00> : vector<2x8xf32>
    %116 = vector.multi_reduction <add>, %115, %cst_23 [2] : vector<2x8x8xf32> to vector<2x8xf32>
    %117 = vector.shape_cast %116 : vector<2x8xf32> to vector<2x8x1xf32>
    %118 = tpu.reciprocal %117 {approx = true} : vector<2x8x1xf32> -> vector<2x8x1xf32>
    %119 = vector.broadcast %118 : vector<2x8x1xf32> to vector<2x8x8xf32>
    %120 = arith.mulf %115, %119 : vector<2x8x8xf32>
    %121 = arith.truncf %120 : vector<2x8x8xf32> to vector<2x8x8xbf16>
    "tpu.trace_start"() <{level = 10 : i32, message = "bqk,bkd->bqd"}> : () -> ()
    %cst_24 = arith.constant dense<0.000000e+00> : vector<2x8x8xf32>
    %122 = tpu.matmul %121, %104, %cst_24 {dimension_numbers = #tpu.dot_dimension_numbers<[2], [1], [1], [2], [0, 0, 0, 1, 1, 2], [0], [0]>} : vector<2x8x8xbf16>, vector<2x8x8xbf16>, vector<2x8x8xf32> -> vector<2x8x8xf32>
    "tpu.trace_stop"() : () -> ()
    %123 = vector.extract_strided_slice %50 {offsets = [0, 0, 24], sizes = [2, 8, 8], strides = [1, 1, 1]} : vector<2x8x32xbf16> to vector<2x8x8xbf16>
    %124 = vector.extract_strided_slice %53 {offsets = [0, 0, 24], sizes = [2, 8, 8], strides = [1, 1, 1]} : vector<2x8x32xbf16> to vector<2x8x8xbf16>
    %125 = vector.extract_strided_slice %56 {offsets = [0, 0, 24], sizes = [2, 8, 8], strides = [1, 1, 1]} : vector<2x8x32xbf16> to vector<2x8x8xbf16>
    "tpu.trace_start"() <{level = 10 : i32, message = "bqd,bkd->bqk"}> : () -> ()
    %cst_25 = arith.constant dense<0.000000e+00> : vector<2x8x8xf32>
    %126 = tpu.matmul %123, %124, %cst_25 {dimension_numbers = #tpu.dot_dimension_numbers<[2], [2], [1], [1], [0, 0, 0, 1, 1, 1], [0], [0]>} : vector<2x8x8xbf16>, vector<2x8x8xbf16>, vector<2x8x8xf32> -> vector<2x8x8xf32>
    "tpu.trace_stop"() : () -> ()
    %127 = vector.shape_cast %59 : vector<8x8xi1> to vector<1x8x8xi1>
    %cst_26 = arith.constant -1.000000e+30 : f32
    %128 = vector.shape_cast %127 : vector<1x8x8xi1> to vector<1x8x8xi1>
    %129 = vector.broadcast %128 : vector<1x8x8xi1> to vector<2x8x8xi1>
    %130 = vector.broadcast %cst_26 : f32 to vector<2x8x8xf32>
    %131 = arith.select %129, %126, %130 : vector<2x8x8xi1>, vector<2x8x8xf32>
    %cst_27 = arith.constant dense<0xFF800000> : vector<2x8xf32>
    %132 = vector.multi_reduction <maximumf>, %131, %cst_27 [2] : vector<2x8x8xf32> to vector<2x8xf32>
    %133 = vector.shape_cast %132 : vector<2x8xf32> to vector<2x8x1xf32>
    %134 = vector.broadcast %133 : vector<2x8x1xf32> to vector<2x8x8xf32>
    %135 = arith.subf %131, %134 : vector<2x8x8xf32>
    %136 = math.exp %135 : vector<2x8x8xf32>
    %cst_28 = arith.constant dense<0.000000e+00> : vector<2x8xf32>
    %137 = vector.multi_reduction <add>, %136, %cst_28 [2] : vector<2x8x8xf32> to vector<2x8xf32>
    %138 = vector.shape_cast %137 : vector<2x8xf32> to vector<2x8x1xf32>
    %139 = tpu.reciprocal %138 {approx = true} : vector<2x8x1xf32> -> vector<2x8x1xf32>
    %140 = vector.broadcast %139 : vector<2x8x1xf32> to vector<2x8x8xf32>
    %141 = arith.mulf %136, %140 : vector<2x8x8xf32>
    %142 = arith.truncf %141 : vector<2x8x8xf32> to vector<2x8x8xbf16>
    "tpu.trace_start"() <{level = 10 : i32, message = "bqk,bkd->bqd"}> : () -> ()
    %cst_29 = arith.constant dense<0.000000e+00> : vector<2x8x8xf32>
    %143 = tpu.matmul %142, %125, %cst_29 {dimension_numbers = #tpu.dot_dimension_numbers<[2], [1], [1], [2], [0, 0, 0, 1, 1, 2], [0], [0]>} : vector<2x8x8xbf16>, vector<2x8x8xbf16>, vector<2x8x8xf32> -> vector<2x8x8xf32>
    "tpu.trace_stop"() : () -> ()
    %144 = tpu.concatenate %80, %101, %122, %143 in 2 : vector<2x8x8xf32>, vector<2x8x8xf32>, vector<2x8x8xf32>, vector<2x8x8xf32> -> vector<2x8x32xf32>
    %145 = vector.shape_cast %144 : vector<2x8x32xf32> to vector<16x32xf32>
    %146 = arith.truncf %145 : vector<16x32xf32> to vector<16x32xbf16>
    %c0_30 = arith.constant 0 : index
    %c0_31 = arith.constant 0 : index
    %147 = vector.load %arg3[%c0_30, %c0_31] : memref<32x32xbf16, #tpu.memory_space<vmem>>, vector<32x32xbf16>
    %cst_32 = arith.constant dense<0.000000e+00> : vector<16x32xf32>
    %148 = tpu.matmul %146, %147, %cst_32 {dimension_numbers = #tpu.dot_dimension_numbers<[1], [0], [0], [1], [0, 0, 1, 1], [], []>} : vector<16x32xbf16>, vector<32x32xbf16>, vector<16x32xf32> -> vector<16x32xf32>
    %149 = vector.shape_cast %13 : vector<32xf32> to vector<1x32xf32>
    %150 = vector.broadcast %149 : vector<1x32xf32> to vector<16x32xf32>
    %151 = arith.addf %148, %150 : vector<16x32xf32>
    %152 = arith.addf %151, %0 : vector<16x32xf32>
    %cst_33 = arith.constant dense<0.000000e+00> : vector<16xf32>
    %153 = vector.multi_reduction <add>, %152, %cst_33 [1] : vector<16x32xf32> to vector<16xf32>
    %154 = vector.shape_cast %153 : vector<16xf32> to vector<16x1xf32>
    %cst_34 = arith.constant 3.200000e+01 : f32
    %155 = vector.broadcast %cst_34 : f32 to vector<16x1xf32>
    %156 = arith.divf %154, %155 : vector<16x1xf32>
    %157 = vector.broadcast %156 : vector<16x1xf32> to vector<16x32xf32>
    %158 = arith.subf %152, %157 : vector<16x32xf32>
    %159 = arith.mulf %158, %158 : vector<16x32xf32>
    %cst_35 = arith.constant dense<0.000000e+00> : vector<16xf32>
    %160 = vector.multi_reduction <add>, %159, %cst_35 [1] : vector<16x32xf32> to vector<16xf32>
    %161 = vector.shape_cast %160 : vector<16xf32> to vector<16x1xf32>
    %cst_36 = arith.constant 3.200000e+01 : f32
    %162 = vector.broadcast %cst_36 : f32 to vector<16x1xf32>
    %163 = arith.divf %161, %162 : vector<16x1xf32>
    %164 = vector.broadcast %156 : vector<16x1xf32> to vector<16x32xf32>
    %165 = arith.subf %152, %164 : vector<16x32xf32>
    %cst_37 = arith.constant 9.99999974E-6 : f32
    %166 = vector.broadcast %cst_37 : f32 to vector<16x1xf32>
    %167 = arith.addf %163, %166 : vector<16x1xf32>
    %168 = math.rsqrt %167 : vector<16x1xf32>
    %169 = vector.broadcast %168 : vector<16x1xf32> to vector<16x32xf32>
    %170 = arith.mulf %165, %169 : vector<16x32xf32>
    %171 = vector.shape_cast %7 : vector<32xf32> to vector<1x32xf32>
    %172 = vector.broadcast %171 : vector<1x32xf32> to vector<16x32xf32>
    %173 = arith.mulf %170, %172 : vector<16x32xf32>
    %174 = vector.shape_cast %9 : vector<32xf32> to vector<1x32xf32>
    %175 = vector.broadcast %174 : vector<1x32xf32> to vector<16x32xf32>
    %176 = arith.addf %173, %175 : vector<16x32xf32>
    %177 = arith.truncf %176 : vector<16x32xf32> to vector<16x32xbf16>
    %c0_38 = arith.constant 0 : index
    %c0_39 = arith.constant 0 : index
    %178 = vector.load %arg4[%c0_38, %c0_39] : memref<32x128xbf16, #tpu.memory_space<vmem>>, vector<32x128xbf16>
    %cst_40 = arith.constant dense<0.000000e+00> : vector<16x128xf32>
    %179 = tpu.matmul %177, %178, %cst_40 {dimension_numbers = #tpu.dot_dimension_numbers<[1], [0], [0], [1], [0, 0, 1, 1], [], []>} : vector<16x32xbf16>, vector<32x128xbf16>, vector<16x128xf32> -> vector<16x128xf32>
    %180 = vector.shape_cast %15 : vector<128xf32> to vector<1x128xf32>
    %181 = vector.broadcast %180 : vector<1x128xf32> to vector<16x128xf32>
    %182 = arith.addf %179, %181 : vector<16x128xf32>
    %cst_41 = arith.constant 5.000000e-01 : f32
    %183 = vector.broadcast %cst_41 : f32 to vector<16x128xf32>
    %184 = arith.mulf %183, %182 : vector<16x128xf32>
    %cst_42 = arith.constant 4.471500e-02 : f32
    %185 = vector.broadcast %cst_42 : f32 to vector<16x128xf32>
    %186 = arith.mulf %185, %182 : vector<16x128xf32>
    %187 = arith.mulf %186, %182 : vector<16x128xf32>
    %188 = arith.mulf %187, %182 : vector<16x128xf32>
    %189 = arith.addf %182, %188 : vector<16x128xf32>
    %cst_43 = arith.constant 0.797884583 : f32
    %190 = vector.broadcast %cst_43 : f32 to vector<16x128xf32>
    %191 = arith.mulf %190, %189 : vector<16x128xf32>
    %192 = math.tanh %191 : vector<16x128xf32>
    %cst_44 = arith.constant 1.000000e+00 : f32
    %193 = vector.broadcast %cst_44 : f32 to vector<16x128xf32>
    %194 = arith.addf %193, %192 : vector<16x128xf32>
    %195 = arith.mulf %184, %194 : vector<16x128xf32>
    %196 = arith.truncf %195 : vector<16x128xf32> to vector<16x128xbf16>
    %c0_45 = arith.constant 0 : index
    %c0_46 = arith.constant 0 : index
    %197 = vector.load %arg5[%c0_45, %c0_46] : memref<128x32xbf16, #tpu.memory_space<vmem>>, vector<128x32xbf16>
    %cst_47 = arith.constant dense<0.000000e+00> : vector<16x32xf32>
    %198 = tpu.matmul %196, %197, %cst_47 {dimension_numbers = #tpu.dot_dimension_numbers<[1], [0], [0], [1], [0, 0, 1, 1], [], []>} : vector<16x128xbf16>, vector<128x32xbf16>, vector<16x32xf32> -> vector<16x32xf32>
    %199 = vector.shape_cast %17 : vector<32xf32> to vector<1x32xf32>
    %200 = vector.broadcast %199 : vector<1x32xf32> to vector<16x32xf32>
    %201 = arith.addf %198, %200 : vector<16x32xf32>
    %202 = arith.addf %152, %201 : vector<16x32xf32>
    %c0_48 = arith.constant 0 : index
    %c0_49 = arith.constant 0 : index
    %203 = vector.load %arg7[%c0_48, %c0_49] : memref<16x32xf32, #tpu.memory_space<vmem>>, vector<16x32xf32>
    tpu.vector_store %arg7[%c0_48, %c0_49], %202 {strides = array<i32>} : memref<16x32xf32, #tpu.memory_space<vmem>>, vector<16x32xf32>,
    return
  }
  func.func @transform_0(%arg0: i32) -> (i32, i32) {
    %c0_i32 = arith.constant 0 : i32
    %c0_i32_0 = arith.constant 0 : i32
    %c0_i32_1 = arith.constant 0 : i32
    return %c0_i32, %c0_i32_0 : i32, i32
  }
  func.func @transform_1(%arg0: i32) -> (i32, i32) {
    %c0_i32 = arith.constant 0 : i32
    %c0_i32_0 = arith.constant 0 : i32
    %c0_i32_1 = arith.constant 0 : i32
    return %c0_i32, %c0_i32_0 : i32, i32
  }
  func.func @transform_2(%arg0: i32) -> (i32, i32) {
    %c0_i32 = arith.constant 0 : i32
    %c0_i32_0 = arith.constant 0 : i32
    %c0_i32_1 = arith.constant 0 : i32
    return %c0_i32, %c0_i32_0 : i32, i32
  }
  func.func @transform_3(%arg0: i32) -> (i32, i32) {
    %c0_i32 = arith.constant 0 : i32
    %c0_i32_0 = arith.constant 0 : i32
    %c0_i32_1 = arith.constant 0 : i32
    return %c0_i32, %c0_i32_0 : i32, i32
  }
  func.func @transform_4(%arg0: i32) -> (i32, i32) {
    %c0_i32 = arith.constant 0 : i32
    %c0_i32_0 = arith.constant 0 : i32
    %c0_i32_1 = arith.constant 0 : i32
    return %c0_i32, %c0_i32_0 : i32, i32
  }
  func.func @transform_5(%arg0: i32) -> (i32, i32) {
    %c0_i32 = arith.constant 0 : i32
    %c0_i32_0 = arith.constant 0 : i32
    %c0_i32_1 = arith.constant 0 : i32
    return %c0_i32, %c0_i32_0 : i32, i32
  }
  func.func @transform_6(%arg0: i32) -> (i32, i32) {
    %c0_i32 = arith.constant 0 : i32
    %c0_i32_0 = arith.constant 0 : i32
    %c0_i32_1 = arith.constant 0 : i32
    return %c0_i32, %c0_i32_0 : i32, i32
  }
}

</mosaic_0001>

<llo_original>
// kernel: tpu_custom_call.1
$region0: #{tpu_custom_call.1}
  #allocation0 [shape = 'u32[]', space=smem, size = 0x4, offset = 0x4, fixed_abs, tag = 'smem constant byte address 0x4 - core index']
  #allocation1 [shape = 'u32[72,128]{1,0:T(1,128)}', space=vmem, size = 0x9000, scoped, tag = 'internal scratch']
  %s0 = inlined_call_operand.vmem [shape: f32[16,32], index: 0, kind: input, shape index: {}]
  %s1 = inlined_call_operand.vmem [shape: bf16[32,96], index: 1, kind: input, shape index: {}]
  %s2 = inlined_call_operand.vmem [shape: bf16[32,32], index: 2, kind: input, shape index: {}]
  %s3 = inlined_call_operand.vmem [shape: bf16[32,128], index: 3, kind: input, shape index: {}]
  %s4 = inlined_call_operand.vmem [shape: bf16[128,32], index: 4, kind: input, shape index: {}]
  %s5 = inlined_call_operand.vmem [shape: f32[8,128], index: 5, kind: input, shape index: {}]
  %s6 = inlined_call_operand.hbm [shape: f32[16,32], index: 6, kind: output, shape index: {}]
  %s7 = sld [smem:[#allocation0]]
  $region34: #{tpu_custom_call.1} parent=0
    _
  %s9 = ssub.s32 1, %s7
  %s10 = scalar_select 0, %s9, %s7
  $region1: #{tpu_custom_call.1} parent=0
    #allocation2 [shape = 'u8[8192]{0}', space=vmem, size = 0x2000, scoped, tag = 'output window, operand 0, single buffered']
    #allocation3 [shape = 's32[1]{0}', space=sflag, size = 0x4, scoped, tag = 'scoped memory for tpu_custom_call.1']
    %11 = vsyncpa [#allocation3], 0
    // Predicated region
    $region2: #{tpu_custom_call.1} parent=1 // pred_check
      _
    $region3: #{tpu_custom_call.1} parent=1 // pred_check_branch
      %13 = sbr.rel (0) target = $region5
    $region4: #{tpu_custom_call.1} parent=1 // pred_region
      _
    $region5: #{tpu_custom_call.1} parent=1 // pred_fallthru
      _
    // Predicated region
    $region6: #{tpu_custom_call.1} parent=1 // pred_check
      _
    $region7: #{tpu_custom_call.1} parent=1 // pred_check_branch
      %15 = sbr.rel (0) target = $region9
    $region8: #{tpu_custom_call.1} parent=1 // pred_region
      _
    $region9: #{tpu_custom_call.1} parent=1 // pred_fallthru
      _
    // Predicated region
    $region10: #{tpu_custom_call.1} parent=1 // pred_check
      _
    $region11: #{tpu_custom_call.1} parent=1 // pred_check_branch
      %17 = sbr.rel (0) target = $region13
    $region12: #{tpu_custom_call.1} parent=1 // pred_region
      _
    $region13: #{tpu_custom_call.1} parent=1 // pred_fallthru
      _
    // Predicated region
    $region14: #{tpu_custom_call.1} parent=1 // pred_check
      _
    $region15: #{tpu_custom_call.1} parent=1 // pred_check_branch
      %19 = sbr.rel (0) target = $region17
    $region16: #{tpu_custom_call.1} parent=1 // pred_region
      _
    $region17: #{tpu_custom_call.1} parent=1 // pred_fallthru
      _
    // Predicated region
    $region18: #{tpu_custom_call.1} parent=1 // pred_check
      _
    $region19: #{tpu_custom_call.1} parent=1 // pred_check_branch
      %21 = sbr.rel (0) target = $region21
    $region20: #{tpu_custom_call.1} parent=1 // pred_region
      _
    $region21: #{tpu_custom_call.1} parent=1 // pred_fallthru
      _
    // Predicated region
    $region22: #{tpu_custom_call.1} parent=1 // pred_check
      _
    $region23: #{tpu_custom_call.1} parent=1 // pred_check_branch
      %23 = sbr.rel (0) target = $region25
    $region24: #{tpu_custom_call.1} parent=1 // pred_region
      _
    $region25: #{tpu_custom_call.1} parent=1 // pred_fallthru
      _
    %v25 = vld [vmem:[%s0] sm:$0xff]
    %v26 = vld [vmem:[%s0 + $0x8] sm:$0xff]
    %v27 = vld [vmem:[%s5] sm:$0xff]
    %vm28 = vcmask 261120
    %v29 = vsel %vm28, %v25, 0.0
    %30 = vadd.xlane.f32.xlu0 %v29
    %v31 = vpop.xlane.xlu0 %30
    %v32 = vsel %vm28, %v26, 0.0
    %33 = vadd.xlane.f32.xlu0 %v32
    %v34 = vpop.xlane.xlu0 %33
    %v35 = vrcp.pop 32.0
    %v36 = vmul.f32 32.0, %v35
    %v37 = vsub.f32 1.0, %v36
    %v38 = vmul.f32 %v35, %v37
    %v39 = vadd.f32 %v35, %v38
    %vm40 = vweird.f32 %v35
    %v41 = vsel %vm40, %v35, %v39
    %v42 = vmul.f32 %v31, %v41
    %v43 = vmul.f32 %v34, %v41
    %v44 = vsub.f32 %v25, %v42
    %v45 = vsub.f32 %v26, %v43
    %v46 = vmul.f32 %v44, %v44
    %v47 = vmul.f32 %v45, %v45
    %v48 = vsel %vm28, %v46, 0.0
    %49 = vadd.xlane.f32.xlu0 %v48
    %v50 = vpop.xlane.xlu0 %49
    %v51 = vsel %vm28, %v47, 0.0
    %52 = vadd.xlane.f32.xlu0 %v51
    %v53 = vpop.xlane.xlu0 %52
    %v54 = vmul.f32 %v50, %v41
    %v55 = vmul.f32 %v53, %v41
    %v56 = vadd.f32 %v54, 1e-05
    %v57 = vadd.f32 %v55, 1e-05
    %v58 = vrsqrt.pop %v56
    %v59 = vmul.f32 %v58, %v56
    %v60 = vmul.f32 %v59, %v58
    %v61 = vmul.f32 0.5, %v60
    %v62 = vsub.f32 1.5, %v61
    %v63 = vmul.f32 %v58, %v62
    %vm64 = vweird.f32 %v56
    %vm65 = vweird.f32 %v58
    %vm66 = vmor %vm64, %vm65
    %v67 = vsel %vm66, %v58, %v63
    %v68 = vrsqrt.pop %v57
    %v69 = vmul.f32 %v68, %v57
    %v70 = vmul.f32 %v69, %v68
    %v71 = vmul.f32 0.5, %v70
    %v72 = vsub.f32 1.5, %v71
    %v73 = vmul.f32 %v68, %v72
    %vm74 = vweird.f32 %v57
    %vm75 = vweird.f32 %v68
    %vm76 = vmor %vm74, %vm75
    %v77 = vsel %vm76, %v68, %v73
    %v78 = vmul.f32 %v44, %v67
    %v79 = vmul.f32 %v45, %v77
    %v80 = vperm.slane %v27, 0
    %v81 = vmul.f32 %v78, %v80
    %v82 = vmul.f32 %v79, %v80
    %v83 = vperm.slane %v27, 1
    %v84 = vadd.f32 %v81, %v83
    %v85 = vadd.f32 %v82, %v83
    %v86 = vpack.c.bf16 %v85, %v84
    %v87 = vld [vmem:[%s1] sm:$0xf]
    %v88 = vld [vmem:[%s1 + $0x4] sm:$0xf]
    %v89 = vld [vmem:[%s1 + $0x8] sm:$0xf]
    %v90 = vld [vmem:[%s1 + $0xc] sm:$0xf]
    %v91 = vperm.slane %v27, 4
    %v96 = vunpack.c.l.b16 %v87
    %v97 = vunpack.c.l.b16 %v88
    %v98 = vunpack.c.l.b16 %v89
    %v99 = vunpack.c.l.b16 %v90
    %v100 = vpack.c.b16 %v97, %v96
    %v101 = vpack.c.b16 %v99, %v98
    %v105 = vsel %vm28, %v86, 0
    %107 = vmatpush.bf16.msra.mxu0 0
    %108 = vmatpush.bf16.msra.mxu0 0
    %109 = vmatpush.bf16.msra.mxu0 0
    %110 = vmatpush.bf16.msra.mxu0 0
    %111 = vmatpush.bf16.msra.mxu0 0
    %112 = vmatpush.bf16.msra.mxu0 0
    %113 = vmatpush.bf16.msra.mxu0 %v101
    %114 = vmatpush.bf16.msra.mxu0 %v100
    %115 = vmatmul.bf16.gmra.mxu0 %v105
    %v116 = vpop.f32.mrf.mxu0
    %v117 = vadd.f32 %v91, %v116
    %v118 = vpop.f32.mrf.mxu0
    %v119 = vadd.f32 %v91, %v118
    %120 = vdwg.mxu0
    %v121 = vpack.c.bf16 %v117, %v117
    %v122 = vpack.c.bf16 %v119, %v119
    %v123 = vlaneseq
    %v124 = vshrl.u32 %v123, 7
    %v125 = vlaneseq
    %v126 = vand.u32 %v125, 127
    %vm127 = vcmp.ge.s32.totalorder %v124, %v126
    %v129 = vunpack.c.l.b16 %v121
    %v130 = vpack.c.b16 %v129, %v129
    %131 = vrot.lane.b32.xlu0 %v130, 96
    %v132 = vpop.permute.xlu0 %131
    %vm133 = vcmask 64512
    %v135 = vsel %vm133, %v121, 0
    %v138 = vsel %vm133, %v132, 0
    %140 = vmatpush.bf16.xpose.msra.mxu0 0
    %141 = vmatpush.bf16.xpose.msra.mxu0 0
    %142 = vmatpush.bf16.xpose.msra.mxu0 0
    %143 = vmatpush.bf16.xpose.msra.mxu0 0
    %144 = vmatpush.bf16.xpose.msra.mxu0 0
    %145 = vmatpush.bf16.xpose.msra.mxu0 0
    %146 = vmatpush.bf16.xpose.msra.mxu0 0
    %147 = vmatpush.bf16.xpose.msra.mxu0 %v138
    %148 = vmatmul.bf16.gmra.mxu0 %v135
    %v149 = vpop.f32.mrf.mxu0
    %v150 = vadd.f32 0.0, %v149
    %v151 = vpop.f32.mrf.mxu0
    %152 = vdwg.mxu0
    %v154 = vunpack.c.l.b16 %v122
    %v155 = vpack.c.b16 %v154, %v154
    %156 = vrot.lane.b32.xlu0 %v155, 96
    %v157 = vpop.permute.xlu0 %156
    %v159 = vsel %vm133, %v122, 0
    %v162 = vsel %vm133, %v157, 0
    %164 = vmatpush.bf16.xpose.msra.mxu0 0
    %165 = vmatpush.bf16.xpose.msra.mxu0 0
    %166 = vmatpush.bf16.xpose.msra.mxu0 0
    %167 = vmatpush.bf16.xpose.msra.mxu0 0
    %168 = vmatpush.bf16.xpose.msra.mxu0 0
    %169 = vmatpush.bf16.xpose.msra.mxu0 0
    %170 = vmatpush.bf16.xpose.msra.mxu0 0
    %171 = vmatpush.bf16.xpose.msra.mxu0 %v162
    %172 = vmatmul.bf16.gmra.mxu0 %v159
    %v173 = vpop.f32.mrf.mxu0
    %v174 = vadd.f32 0.0, %v173
    %v175 = vpop.f32.mrf.mxu0
    %176 = vdwg.mxu0
    %v177 = vsel %vm127, 1, 0
    %vm178 = vcmp.eq.s32.totalorder %v177, 1
    %v179 = vsel %vm178, %v150, -1e+30
    %v180 = vsel %vm178, %v174, -1e+30
    %v181 = vsel %vm133, %v179, -inf
    %182 = vmax.xlane.f32.xlu0 %v181
    %v183 = vpop.xlane.xlu0 %182
    %v184 = vsel %vm133, %v180, -inf
    %185 = vmax.xlane.f32.xlu0 %v184
    %v186 = vpop.xlane.xlu0 %185
    %v187 = vsub.f32 %v179, %v183
    %v188 = vsub.f32 %v180, %v186
    %v189 = vmul.f32 %v187, 1.442695
    %v190 = vpow.pop %v189
    %v191 = vmul.f32 %v188, 1.442695
    %v192 = vpow.pop %v191
    %v193 = vsel %vm133, %v190, 0.0
    %194 = vadd.xlane.f32.xlu0 %v193
    %v195 = vpop.xlane.xlu0 %194
    %v196 = vsel %vm133, %v192, 0.0
    %197 = vadd.xlane.f32.xlu0 %v196
    %v198 = vpop.xlane.xlu0 %197
    %v199 = vrcp.pop %v195
    %v200 = vrcp.pop %v198
    %v201 = vmul.f32 %v190, %v199
    %v202 = vmul.f32 %v192, %v200
    %v203 = vpack.c.bf16 %v201, %v201
    %v204 = vpack.c.bf16 %v202, %v202
    %205 = vrot.lane.b32.xlu0 %v130, 64
    %v206 = vpop.permute.xlu0 %205
    %v208 = vsel %vm133, %v203, 0
    %vm210 = vcmask 1043456
    %v212 = vsel %vm210, %v206, 0
    %214 = vmatpush.bf16.msra.mxu0 0
    %215 = vmatpush.bf16.msra.mxu0 0
    %216 = vmatpush.bf16.msra.mxu0 0
    %217 = vmatpush.bf16.msra.mxu0 0
    %218 = vmatpush.bf16.msra.mxu0 0
    %219 = vmatpush.bf16.msra.mxu0 0
    %220 = vmatpush.bf16.msra.mxu0 0
    %221 = vmatpush.bf16.msra.mxu0 %v212
    %222 = vmatmul.bf16.gmra.mxu0 %v208
    %v223 = vpop.f32.mrf.mxu0
    %v224 = vadd.f32 0.0, %v223
    %v225 = vpop.f32.mrf.mxu0
    %226 = vdwg.mxu0
    %227 = vrot.lane.b32.xlu0 %v155, 64
    %v228 = vpop.permute.xlu0 %227
    %v230 = vsel %vm133, %v204, 0
    %v233 = vsel %vm210, %v228, 0
    %235 = vmatpush.bf16.msra.mxu0 0
    %236 = vmatpush.bf16.msra.mxu0 0
    %237 = vmatpush.bf16.msra.mxu0 0
    %238 = vmatpush.bf16.msra.mxu0 0
    %239 = vmatpush.bf16.msra.mxu0 0
    %240 = vmatpush.bf16.msra.mxu0 0
    %241 = vmatpush.bf16.msra.mxu0 0
    %242 = vmatpush.bf16.msra.mxu0 %v233
    %243 = vmatmul.bf16.gmra.mxu0 %v230
    %v244 = vpop.f32.mrf.mxu0
    %v245 = vadd.f32 0.0, %v244
    %v246 = vpop.f32.mrf.mxu0
    %247 = vdwg.mxu0
    %248 = vrot.lane.b32.xlu0 %v130, 120
    %v249 = vpop.permute.xlu0 %248
    %250 = vrot.lane.b32.xlu0 %v130, 88
    %v251 = vpop.permute.xlu0 %250
    %v253 = vsel %vm133, %v249, 0
    %v256 = vsel %vm133, %v251, 0
    %258 = vmatpush.bf16.xpose.msra.mxu0 0
    %259 = vmatpush.bf16.xpose.msra.mxu0 0
    %260 = vmatpush.bf16.xpose.msra.mxu0 0
    %261 = vmatpush.bf16.xpose.msra.mxu0 0
    %262 = vmatpush.bf16.xpose.msra.mxu0 0
    %263 = vmatpush.bf16.xpose.msra.mxu0 0
    %264 = vmatpush.bf16.xpose.msra.mxu0 0
    %265 = vmatpush.bf16.xpose.msra.mxu0 %v256
    %266 = vmatmul.bf16.gmra.mxu0 %v253
    %v267 = vpop.f32.mrf.mxu0
    %v268 = vadd.f32 0.0, %v267
    %v269 = vpop.f32.mrf.mxu0
    %270 = vdwg.mxu0
    %271 = vrot.lane.b32.xlu0 %v155, 120
    %v272 = vpop.permute.xlu0 %271
    %273 = vrot.lane.b32.xlu0 %v155, 88
    %v274 = vpop.permute.xlu0 %273
    %v276 = vsel %vm133, %v272, 0
    %v279 = vsel %vm133, %v274, 0
    %281 = vmatpush.bf16.xpose.msra.mxu0 0
    %282 = vmatpush.bf16.xpose.msra.mxu0 0
    %283 = vmatpush.bf16.xpose.msra.mxu0 0
    %284 = vmatpush.bf16.xpose.msra.mxu0 0
    %285 = vmatpush.bf16.xpose.msra.mxu0 0
    %286 = vmatpush.bf16.xpose.msra.mxu0 0
    %287 = vmatpush.bf16.xpose.msra.mxu0 0
    %288 = vmatpush.bf16.xpose.msra.mxu0 %v279
    %289 = vmatmul.bf16.gmra.mxu0 %v276
    %v290 = vpop.f32.mrf.mxu0
    %v291 = vadd.f32 0.0, %v290
    %v292 = vpop.f32.mrf.mxu0
    %293 = vdwg.mxu0
    %v294 = vsel %vm178, %v268, -1e+30
    %v295 = vsel %vm178, %v291, -1e+30
    %v296 = vsel %vm133, %v294, -inf
    %297 = vmax.xlane.f32.xlu0 %v296
    %v298 = vpop.xlane.xlu0 %297
    %v299 = vsel %vm133, %v295, -inf
    %300 = vmax.xlane.f32.xlu0 %v299
    %v301 = vpop.xlane.xlu0 %300
    %v302 = vsub.f32 %v294, %v298
    %v303 = vsub.f32 %v295, %v301
    %v304 = vmul.f32 %v302, 1.442695
    %v305 = vpow.pop %v304
    %v306 = vmul.f32 %v303, 1.442695
    %v307 = vpow.pop %v306
    %v308 = vsel %vm133, %v305, 0.0
    %309 = vadd.xlane.f32.xlu0 %v308
    %v310 = vpop.xlane.xlu0 %309
    %v311 = vsel %vm133, %v307, 0.0
    %312 = vadd.xlane.f32.xlu0 %v311
    %v313 = vpop.xlane.xlu0 %312
    %v314 = vrcp.pop %v310
    %v315 = vrcp.pop %v313
    %v316 = vmul.f32 %v305, %v314
    %v317 = vmul.f32 %v307, %v315
    %v318 = vpack.c.bf16 %v316, %v316
    %v319 = vpack.c.bf16 %v317, %v317
    %320 = vrot.lane.b32.xlu0 %v130, 56
    %v321 = vpop.permute.xlu0 %320
    %v323 = vsel %vm133, %v318, 0
    %v326 = vsel %vm210, %v321, 0
    %328 = vmatpush.bf16.msra.mxu0 0
    %329 = vmatpush.bf16.msra.mxu0 0
    %330 = vmatpush.bf16.msra.mxu0 0
    %331 = vmatpush.bf16.msra.mxu0 0
    %332 = vmatpush.bf16.msra.mxu0 0
    %333 = vmatpush.bf16.msra.mxu0 0
    %334 = vmatpush.bf16.msra.mxu0 0
    %335 = vmatpush.bf16.msra.mxu0 %v326
    %336 = vmatmul.bf16.gmra.mxu0 %v323
    %v337 = vpop.f32.mrf.mxu0
    %v338 = vadd.f32 0.0, %v337
    %v339 = vpop.f32.mrf.mxu0
    %340 = vdwg.mxu0
    %341 = vrot.lane.b32.xlu0 %v155, 56
    %v342 = vpop.permute.xlu0 %341
    %v344 = vsel %vm133, %v319, 0
    %v347 = vsel %vm210, %v342, 0
    %349 = vmatpush.bf16.msra.mxu0 0
    %350 = vmatpush.bf16.msra.mxu0 0
    %351 = vmatpush.bf16.msra.mxu0 0
    %352 = vmatpush.bf16.msra.mxu0 0
    %353 = vmatpush.bf16.msra.mxu0 0
    %354 = vmatpush.bf16.msra.mxu0 0
    %355 = vmatpush.bf16.msra.mxu0 0
    %356 = vmatpush.bf16.msra.mxu0 %v347
    %357 = vmatmul.bf16.gmra.mxu0 %v344
    %v358 = vpop.f32.mrf.mxu0
    %v359 = vadd.f32 0.0, %v358
    %v360 = vpop.f32.mrf.mxu0
    %361 = vdwg.mxu0
    %362 = vrot.lane.b32.xlu0 %v130, 112
    %v363 = vpop.permute.xlu0 %362
    %364 = vrot.lane.b32.xlu0 %v130, 80
    %v365 = vpop.permute.xlu0 %364
    %v367 = vsel %vm133, %v363, 0
    %v370 = vsel %vm133, %v365, 0
    %372 = vmatpush.bf16.xpose.msra.mxu0 0
    %373 = vmatpush.bf16.xpose.msra.mxu0 0
    %374 = vmatpush.bf16.xpose.msra.mxu0 0
    %375 = vmatpush.bf16.xpose.msra.mxu0 0
    %376 = vmatpush.bf16.xpose.msra.mxu0 0
    %377 = vmatpush.bf16.xpose.msra.mxu0 0
    %378 = vmatpush.bf16.xpose.msra.mxu0 0
    %379 = vmatpush.bf16.xpose.msra.mxu0 %v370
    %380 = vmatmul.bf16.gmra.mxu0 %v367
    %v381 = vpop.f32.mrf.mxu0
    %v382 = vadd.f32 0.0, %v381
    %v383 = vpop.f32.mrf.mxu0
    %384 = vdwg.mxu0
    %385 = vrot.lane.b32.xlu0 %v155, 112
    %v386 = vpop.permute.xlu0 %385
    %387 = vrot.lane.b32.xlu0 %v155, 80
    %v388 = vpop.permute.xlu0 %387
    %v390 = vsel %vm133, %v386, 0
    %v393 = vsel %vm133, %v388, 0
    %395 = vmatpush.bf16.xpose.msra.mxu0 0
    %396 = vmatpush.bf16.xpose.msra.mxu0 0
    %397 = vmatpush.bf16.xpose.msra.mxu0 0
    %398 = vmatpush.bf16.xpose.msra.mxu0 0
    %399 = vmatpush.bf16.xpose.msra.mxu0 0
    %400 = vmatpush.bf16.xpose.msra.mxu0 0
    %401 = vmatpush.bf16.xpose.msra.mxu0 0
    %402 = vmatpush.bf16.xpose.msra.mxu0 %v393
    %403 = vmatmul.bf16.gmra.mxu0 %v390
    %v404 = vpop.f32.mrf.mxu0
    %v405 = vadd.f32 0.0, %v404
    %v406 = vpop.f32.mrf.mxu0
    %407 = vdwg.mxu0
    %v408 = vsel %vm178, %v382, -1e+30
    %v409 = vsel %vm178, %v405, -1e+30
    %v410 = vsel %vm133, %v408, -inf
    %411 = vmax.xlane.f32.xlu0 %v410
    %v412 = vpop.xlane.xlu0 %411
    %v413 = vsel %vm133, %v409, -inf
    %414 = vmax.xlane.f32.xlu0 %v413
    %v415 = vpop.xlane.xlu0 %414
    %v416 = vsub.f32 %v408, %v412
    %v417 = vsub.f32 %v409, %v415
    %v418 = vmul.f32 %v416, 1.442695
    %v419 = vpow.pop %v418
    %v420 = vmul.f32 %v417, 1.442695
    %v421 = vpow.pop %v420
    %v422 = vsel %vm133, %v419, 0.0
    %423 = vadd.xlane.f32.xlu0 %v422
    %v424 = vpop.xlane.xlu0 %423
    %v425 = vsel %vm133, %v421, 0.0
    %426 = vadd.xlane.f32.xlu0 %v425
    %v427 = vpop.xlane.xlu0 %426
    %v428 = vrcp.pop %v424
    %v429 = vrcp.pop %v427
    %v430 = vmul.f32 %v419, %v428
    %v431 = vmul.f32 %v421, %v429
    %v432 = vpack.c.bf16 %v430, %v430
    %v433 = vpack.c.bf16 %v431, %v431
    %434 = vrot.lane.b32.xlu0 %v130, 48
    %v435 = vpop.permute.xlu0 %434
    %v437 = vsel %vm133, %v432, 0
    %v440 = vsel %vm210, %v435, 0
    %442 = vmatpush.bf16.msra.mxu0 0
    %443 = vmatpush.bf16.msra.mxu0 0
    %444 = vmatpush.bf16.msra.mxu0 0
    %445 = vmatpush.bf16.msra.mxu0 0
    %446 = vmatpush.bf16.msra.mxu0 0
    %447 = vmatpush.bf16.msra.mxu0 0
    %448 = vmatpush.bf16.msra.mxu0 0
    %449 = vmatpush.bf16.msra.mxu0 %v440
    %450 = vmatmul.bf16.gmra.mxu0 %v437
    %v451 = vpop.f32.mrf.mxu0
    %v452 = vadd.f32 0.0, %v451
    %v453 = vpop.f32.mrf.mxu0
    %454 = vdwg.mxu0
    %455 = vrot.lane.b32.xlu0 %v155, 48
    %v456 = vpop.permute.xlu0 %455
    %v458 = vsel %vm133, %v433, 0
    %v461 = vsel %vm210, %v456, 0
    %463 = vmatpush.bf16.msra.mxu0 0
    %464 = vmatpush.bf16.msra.mxu0 0
    %465 = vmatpush.bf16.msra.mxu0 0
    %466 = vmatpush.bf16.msra.mxu0 0
    %467 = vmatpush.bf16.msra.mxu0 0
    %468 = vmatpush.bf16.msra.mxu0 0
    %469 = vmatpush.bf16.msra.mxu0 0
    %470 = vmatpush.bf16.msra.mxu0 %v461
    %471 = vmatmul.bf16.gmra.mxu0 %v458
    %v472 = vpop.f32.mrf.mxu0
    %v473 = vadd.f32 0.0, %v472
    %v474 = vpop.f32.mrf.mxu0
    %475 = vdwg.mxu0
    %476 = vrot.lane.b32.xlu0 %v130, 104
    %v477 = vpop.permute.xlu0 %476
    %478 = vrot.lane.b32.xlu0 %v130, 72
    %v479 = vpop.permute.xlu0 %478
    %v481 = vsel %vm133, %v477, 0
    %v484 = vsel %vm133, %v479, 0
    %486 = vmatpush.bf16.xpose.msra.mxu0 0
    %487 = vmatpush.bf16.xpose.msra.mxu0 0
    %488 = vmatpush.bf16.xpose.msra.mxu0 0
    %489 = vmatpush.bf16.xpose.msra.mxu0 0
    %490 = vmatpush.bf16.xpose.msra.mxu0 0
    %491 = vmatpush.bf16.xpose.msra.mxu0 0
    %492 = vmatpush.bf16.xpose.msra.mxu0 0
    %493 = vmatpush.bf16.xpose.msra.mxu0 %v484
    %494 = vmatmul.bf16.gmra.mxu0 %v481
    %v495 = vpop.f32.mrf.mxu0
    %v496 = vadd.f32 0.0, %v495
    %v497 = vpop.f32.mrf.mxu0
    %498 = vdwg.mxu0
    %499 = vrot.lane.b32.xlu0 %v155, 104
    %v500 = vpop.permute.xlu0 %499
    %501 = vrot.lane.b32.xlu0 %v155, 72
    %v502 = vpop.permute.xlu0 %501
    %v504 = vsel %vm133, %v500, 0
    %v507 = vsel %vm133, %v502, 0
    %509 = vmatpush.bf16.xpose.msra.mxu0 0
    %510 = vmatpush.bf16.xpose.msra.mxu0 0
    %511 = vmatpush.bf16.xpose.msra.mxu0 0
    %512 = vmatpush.bf16.xpose.msra.mxu0 0
    %513 = vmatpush.bf16.xpose.msra.mxu0 0
    %514 = vmatpush.bf16.xpose.msra.mxu0 0
    %515 = vmatpush.bf16.xpose.msra.mxu0 0
    %516 = vmatpush.bf16.xpose.msra.mxu0 %v507
    %517 = vmatmul.bf16.gmra.mxu0 %v504
    %v518 = vpop.f32.mrf.mxu0
    %v519 = vadd.f32 0.0, %v518
    %v520 = vpop.f32.mrf.mxu0
    %521 = vdwg.mxu0
    %v522 = vsel %vm178, %v496, -1e+30
    %v523 = vsel %vm178, %v519, -1e+30
    %v524 = vsel %vm133, %v522, -inf
    %525 = vmax.xlane.f32.xlu0 %v524
    %v526 = vpop.xlane.xlu0 %525
    %v527 = vsel %vm133, %v523, -inf
    %528 = vmax.xlane.f32.xlu0 %v527
    %v529 = vpop.xlane.xlu0 %528
    %v530 = vsub.f32 %v522, %v526
    %v531 = vsub.f32 %v523, %v529
    %v532 = vmul.f32 %v530, 1.442695
    %v533 = vpow.pop %v532
    %v534 = vmul.f32 %v531, 1.442695
    %v535 = vpow.pop %v534
    %v536 = vsel %vm133, %v533, 0.0
    %537 = vadd.xlane.f32.xlu0 %v536
    %v538 = vpop.xlane.xlu0 %537
    %v539 = vsel %vm133, %v535, 0.0
    %540 = vadd.xlane.f32.xlu0 %v539
    %v541 = vpop.xlane.xlu0 %540
    %v542 = vrcp.pop %v538
    %v543 = vrcp.pop %v541
    %v544 = vmul.f32 %v533, %v542
    %v545 = vmul.f32 %v535, %v543
    %v546 = vpack.c.bf16 %v544, %v544
    %v547 = vpack.c.bf16 %v545, %v545
    %548 = vrot.lane.b32.xlu0 %v130, 40
    %v549 = vpop.permute.xlu0 %548
    %v551 = vsel %vm133, %v546, 0
    %v554 = vsel %vm210, %v549, 0
    %556 = vmatpush.bf16.msra.mxu0 0
    %557 = vmatpush.bf16.msra.mxu0 0
    %558 = vmatpush.bf16.msra.mxu0 0
    %559 = vmatpush.bf16.msra.mxu0 0
    %560 = vmatpush.bf16.msra.mxu0 0
    %561 = vmatpush.bf16.msra.mxu0 0
    %562 = vmatpush.bf16.msra.mxu0 0
    %563 = vmatpush.bf16.msra.mxu0 %v554
    %564 = vmatmul.bf16.gmra.mxu0 %v551
    %v565 = vpop.f32.mrf.mxu0
    %v566 = vadd.f32 0.0, %v565
    %v567 = vpop.f32.mrf.mxu0
    %568 = vdwg.mxu0
    %569 = vrot.lane.b32.xlu0 %v155, 40
    %v570 = vpop.permute.xlu0 %569
    %v572 = vsel %vm133, %v547, 0
    %v575 = vsel %vm210, %v570, 0
    %577 = vmatpush.bf16.msra.mxu0 0
    %578 = vmatpush.bf16.msra.mxu0 0
    %579 = vmatpush.bf16.msra.mxu0 0
    %580 = vmatpush.bf16.msra.mxu0 0
    %581 = vmatpush.bf16.msra.mxu0 0
    %582 = vmatpush.bf16.msra.mxu0 0
    %583 = vmatpush.bf16.msra.mxu0 0
    %584 = vmatpush.bf16.msra.mxu0 %v575
    %585 = vmatmul.bf16.gmra.mxu0 %v572
    %v586 = vpop.f32.mrf.mxu0
    %v587 = vadd.f32 0.0, %v586
    %v588 = vpop.f32.mrf.mxu0
    %589 = vdwg.mxu0
    %592 = vrot.lane.b32.xlu0 %v338, 8
    %v593 = vpop.permute.xlu0 %592
    %594 = vrot.lane.b32.xlu0 %v359, 8
    %v595 = vpop.permute.xlu0 %594
    %600 = vrot.lane.b32.xlu0 %v452, 16
    %v601 = vpop.permute.xlu0 %600
    %602 = vrot.lane.b32.xlu0 %v473, 16
    %v603 = vpop.permute.xlu0 %602
    %608 = vrot.lane.b32.xlu0 %v566, 24
    %v609 = vpop.permute.xlu0 %608
    %610 = vrot.lane.b32.xlu0 %v587, 24
    %v611 = vpop.permute.xlu0 %610
    %v614 = vsel %vm133, %v224, %v593
    %v615 = vsel %vm133, %v245, %v595
    %vm616 = vcmask 130048
    %v617 = vsel %vm616, %v614, %v601
    %v618 = vsel %vm616, %v615, %v603
    %vm619 = vcmask 195584
    %v620 = vsel %vm619, %v617, %v609
    %v621 = vsel %vm619, %v618, %v611
    %v622 = vpack.c.bf16 %v621, %v620
    %v623 = vld [vmem:[%s2] sm:$0xf]
    %v624 = vld [vmem:[%s2 + $0x4] sm:$0xf]
    %v625 = vld [vmem:[%s2 + $0x8] sm:$0xf]
    %v626 = vld [vmem:[%s2 + $0xc] sm:$0xf]
    %v627 = vperm.slane %v27, 5
    %v632 = vunpack.c.l.b16 %v623
    %v633 = vunpack.c.l.b16 %v624
    %v634 = vunpack.c.l.b16 %v625
    %v635 = vunpack.c.l.b16 %v626
    %v636 = vpack.c.b16 %v633, %v632
    %v637 = vpack.c.b16 %v635, %v634
    %v641 = vsel %vm28, %v622, 0
    %643 = vmatpush.bf16.msra.mxu0 0
    %644 = vmatpush.bf16.msra.mxu0 0
    %645 = vmatpush.bf16.msra.mxu0 0
    %646 = vmatpush.bf16.msra.mxu0 0
    %647 = vmatpush.bf16.msra.mxu0 0
    %648 = vmatpush.bf16.msra.mxu0 0
    %649 = vmatpush.bf16.msra.mxu0 %v637
    %650 = vmatpush.bf16.msra.mxu0 %v636
    %651 = vmatmul.bf16.gmra.mxu0 %v641
    %v652 = vpop.f32.mrf.mxu0
    %v653 = vadd.f32 %v627, %v652
    %v654 = vpop.f32.mrf.mxu0
    %v655 = vadd.f32 %v627, %v654
    %656 = vdwg.mxu0
    %v657 = vadd.f32 %v653, %v25
    %v658 = vadd.f32 %v655, %v26
    %v659 = vsel %vm28, %v657, 0.0
    %660 = vadd.xlane.f32.xlu0 %v659
    %v661 = vpop.xlane.xlu0 %660
    %v662 = vsel %vm28, %v658, 0.0
    %663 = vadd.xlane.f32.xlu0 %v662
    %v664 = vpop.xlane.xlu0 %663
    %v665 = vmul.f32 %v661, %v41
    %v666 = vmul.f32 %v664, %v41
    %v667 = vsub.f32 %v657, %v665
    %v668 = vsub.f32 %v658, %v666
    %v669 = vmul.f32 %v667, %v667
    %v670 = vmul.f32 %v668, %v668
    %v671 = vsel %vm28, %v669, 0.0
    %672 = vadd.xlane.f32.xlu0 %v671
    %v673 = vpop.xlane.xlu0 %672
    %v674 = vsel %vm28, %v670, 0.0
    %675 = vadd.xlane.f32.xlu0 %v674
    %v676 = vpop.xlane.xlu0 %675
    %v677 = vmul.f32 %v673, %v41
    %v678 = vmul.f32 %v676, %v41
    %v679 = vadd.f32 %v677, 1e-05
    %v680 = vadd.f32 %v678, 1e-05
    %v681 = vrsqrt.pop %v679
    %v682 = vmul.f32 %v681, %v679
    %v683 = vmul.f32 %v682, %v681
    %v684 = vmul.f32 0.5, %v683
    %v685 = vsub.f32 1.5, %v684
    %v686 = vmul.f32 %v681, %v685
    %vm687 = vweird.f32 %v679
    %vm688 = vweird.f32 %v681
    %vm689 = vmor %vm687, %vm688
    %v690 = vsel %vm689, %v681, %v686
    %v691 = vrsqrt.pop %v680
    %v692 = vmul.f32 %v691, %v680
    %v693 = vmul.f32 %v692, %v691
    %v694 = vmul.f32 0.5, %v693
    %v695 = vsub.f32 1.5, %v694
    %v696 = vmul.f32 %v691, %v695
    %vm697 = vweird.f32 %v680
    %vm698 = vweird.f32 %v691
    %vm699 = vmor %vm697, %vm698
    %v700 = vsel %vm699, %v691, %v696
    %v701 = vmul.f32 %v667, %v690
    %v702 = vmul.f32 %v668, %v700
    %v703 = vperm.slane %v27, 2
    %v704 = vmul.f32 %v701, %v703
    %v705 = vmul.f32 %v702, %v703
    %v706 = vperm.slane %v27, 3
    %v707 = vadd.f32 %v704, %v706
    %v708 = vadd.f32 %v705, %v706
    %v709 = vpack.c.bf16 %v708, %v707
    %v710 = vld [vmem:[%s3] sm:$0xf]
    %v711 = vld [vmem:[%s3 + $0x4] sm:$0xf]
    %v712 = vld [vmem:[%s3 + $0x8] sm:$0xf]
    %v713 = vld [vmem:[%s3 + $0xc] sm:$0xf]
    %v714 = vperm.slane %v27, 6
    %v719 = vunpack.c.l.b16 %v710
    %v720 = vunpack.c.l.b16 %v711
    %v721 = vunpack.c.l.b16 %v712
    %v722 = vunpack.c.l.b16 %v713
    %v723 = vpack.c.b16 %v720, %v719
    %v724 = vpack.c.b16 %v722, %v721
    %v728 = vsel %vm28, %v709, 0
    %730 = vmatpush.bf16.msra.mxu0 0
    %731 = vmatpush.bf16.msra.mxu0 0
    %732 = vmatpush.bf16.msra.mxu0 0
    %733 = vmatpush.bf16.msra.mxu0 0
    %734 = vmatpush.bf16.msra.mxu0 0
    %735 = vmatpush.bf16.msra.mxu0 0
    %736 = vmatpush.bf16.msra.mxu0 %v724
    %737 = vmatpush.bf16.msra.mxu0 %v723
    %738 = vmatmul.bf16.gmra.mxu0 %v728
    %v739 = vpop.f32.mrf.mxu0
    %v740 = vadd.f32 %v714, %v739
    %v741 = vpop.f32.mrf.mxu0
    %v742 = vadd.f32 %v714, %v741
    %743 = vdwg.mxu0
    %v744 = vmul.f32 %v740, 0.5
    %v745 = vmul.f32 %v742, 0.5
    %v746 = vmul.f32 %v740, 0.044715
    %v747 = vmul.f32 %v742, 0.044715
    %v748 = vmul.f32 %v746, %v740
    %v749 = vmul.f32 %v747, %v742
    %v750 = vmul.f32 %v748, %v740
    %v751 = vmul.f32 %v749, %v742
    %v752 = vadd.f32 %v740, %v750
    %v753 = vadd.f32 %v742, %v751
    %v754 = vmul.f32 %v752, 0.7978846
    %v755 = vmul.f32 %v753, 0.7978846
    %v756 = vtanh.pop %v754
    %v757 = vtanh.pop %v755
    %v758 = vadd.f32 %v756, 1.0
    %v759 = vadd.f32 %v757, 1.0
    %v760 = vmul.f32 %v744, %v758
    %v761 = vmul.f32 %v745, %v759
    %v762 = vpack.c.bf16 %v761, %v760
    %v763 = vld [vmem:[%s4] sm:$0xf]
    %v764 = vld [vmem:[%s4 + $0x4] sm:$0xf]
    %v765 = vld [vmem:[%s4 + $0x8] sm:$0xf]
    %v766 = vld [vmem:[%s4 + $0xc] sm:$0xf]
    %v767 = vld [vmem:[%s4 + $0x10] sm:$0xf]
    %v768 = vld [vmem:[%s4 + $0x14] sm:$0xf]
    %v769 = vld [vmem:[%s4 + $0x18] sm:$0xf]
    %v770 = vld [vmem:[%s4 + $0x1c] sm:$0xf]
    %v771 = vld [vmem:[%s4 + $0x20] sm:$0xf]
    %v772 = vld [vmem:[%s4 + $0x24] sm:$0xf]
    %v773 = vld [vmem:[%s4 + $0x28] sm:$0xf]
    %v774 = vld [vmem:[%s4 + $0x2c] sm:$0xf]
    %v775 = vld [vmem:[%s4 + $0x30] sm:$0xf]
    %v776 = vld [vmem:[%s4 + $0x34] sm:$0xf]
    %v777 = vld [vmem:[%s4 + $0x38] sm:$0xf]
    %v778 = vld [vmem:[%s4 + $0x3c] sm:$0xf]
    %v779 = vperm.slane %v27, 7
    %v796 = vunpack.c.l.b16 %v763
    %v797 = vunpack.c.l.b16 %v764
    %v798 = vunpack.c.l.b16 %v765
    %v799 = vunpack.c.l.b16 %v766
    %v800 = vunpack.c.l.b16 %v767
    %v801 = vunpack.c.l.b16 %v768
    %v802 = vunpack.c.l.b16 %v769
    %v803 = vunpack.c.l.b16 %v770
    %v804 = vunpack.c.l.b16 %v771
    %v805 = vunpack.c.l.b16 %v772
    %v806 = vunpack.c.l.b16 %v773
    %v807 = vunpack.c.l.b16 %v774
    %v808 = vunpack.c.l.b16 %v775
    %v809 = vunpack.c.l.b16 %v776
    %v810 = vunpack.c.l.b16 %v777
    %v811 = vunpack.c.l.b16 %v778
    %v812 = vpack.c.b16 %v797, %v796
    %v813 = vpack.c.b16 %v799, %v798
    %v814 = vpack.c.b16 %v801, %v800
    %v815 = vpack.c.b16 %v803, %v802
    %v816 = vpack.c.b16 %v805, %v804
    %v817 = vpack.c.b16 %v807, %v806
    %v818 = vpack.c.b16 %v809, %v808
    %v819 = vpack.c.b16 %v811, %v810
    %828 = vmatpush.bf16.msra.mxu0 %v819
    %829 = vmatpush.bf16.msra.mxu0 %v818
    %830 = vmatpush.bf16.msra.mxu0 %v817
    %831 = vmatpush.bf16.msra.mxu0 %v816
    %832 = vmatpush.bf16.msra.mxu0 %v815
    %833 = vmatpush.bf16.msra.mxu0 %v814
    %834 = vmatpush.bf16.msra.mxu0 %v813
    %835 = vmatpush.bf16.msra.mxu0 %v812
    %836 = vmatmul.bf16.gmra.mxu0 %v762
    %v837 = vpop.f32.mrf.mxu0
    %v838 = vadd.f32 %v779, %v837
    %v839 = vpop.f32.mrf.mxu0
    %v840 = vadd.f32 %v779, %v839
    %841 = vdwg.mxu0
    %v842 = vadd.f32 %v657, %v838
    %v843 = vadd.f32 %v658, %v840
    %844 = vst.msk [vmem:[#allocation2] sm:$0xff] %vm28, %v842
    %845 = vst.msk [vmem:[#allocation2 + $0x8] sm:$0xff] %vm28, %v843
    // Predicated region
    $region26: #{tpu_custom_call.1} parent=1 // pred_check
      _
    $region27: #{tpu_custom_call.1} parent=1 // pred_check_branch
      %847 = sbr.rel (0) target = $region29
    $region28: #{tpu_custom_call.1} parent=1 // pred_region
      %849 = vsyncadd [#allocation3], 0
      %s850 = sshll.u32 [#allocation2], 4
      %s851 = int_to_ptr.vmem [resolvable:$true] %s850
      %s852 = sshll.u32 %s6, 4
      %s853 = int_to_ptr.hbm [resolvable:$true] %s852
      %858 = dma.vmem_to_hbm [thread:$0]  %s851, 256, %s853, [#allocation3], 128, 128, 8
    $region29: #{tpu_custom_call.1} parent=1 // pred_fallthru
      _
    // Predicated region
    $region30: #{tpu_custom_call.1} parent=1 // pred_check
      _
    $region31: #{tpu_custom_call.1} parent=1 // pred_check_branch
      %860 = sbr.rel (0) target = $region33
    $region32: #{tpu_custom_call.1} parent=1 // pred_region
      %862 = dma.done [#allocation3], 256
    $region33: #{tpu_custom_call.1} parent=1 // pred_fallthru
      _
    %863 = vsyncpa [#allocation3], 1

</llo_original>
